<compile_context>
chip_gen: v7x
topology: tpu7x:2x2x1
jax: 0.10.0
libtpu: 0.0.40
codegen_flags: <defaults>
</compile_context>

<pallas_src>
import functools

import jax
import jax.numpy as jnp
from jax.experimental import pallas as pl
from jax.experimental.pallas import tpu as pltpu


def _pick_tile(dim, unit, target):
    """Largest multiple of `unit` <= target that divides dim, else dim itself.

    Returning a divisor (or the full dim) keeps every grid exact (no dropped
    tail) and every block aligned; the full-dim fallback can only cost VMEM
    for pathological prime-ish sizes (performance, not correctness).
    """
    target = max(unit, int(target))
    if dim <= target:
        return dim
    t = (target // unit) * unit
    while t >= unit:
        if dim % t == 0:
            return t
        t -= unit
    return dim


def _vmem_capacity_bytes():
    try:
        return int(pltpu.get_tpu_info().vmem_capacity_bytes)
    except Exception:
        return 64 * 1024 * 1024  # unknown -> assume the smallest (v7x) VMEM


def _stats_scale_shift_kernel(xs_ref, src_mean_ref, src_var_ref, gamma_ref,
                              beta_ref, scale_ref, shift_ref, mean_sc, m2_sc,
                              *, block_cnt, total_cnt, prior, eps):
    """Per-channel stats of the D=8 slice, read straight out of x.

    Block = (C, th, W) slab of x[:, :, 8] for one (n, h-tile); blockwise
    Welford/Chan combine across the grid; on the last step the prior-mixed
    stats and affine params are folded into per-channel (scale, shift).
    """
    t = pl.program_id(0) * pl.num_programs(1) + pl.program_id(1)
    nt = pl.num_programs(0) * pl.num_programs(1)

    x = xs_ref[...].astype(jnp.float32)               # (C, th, W)
    c, th, w = x.shape
    xs = x.reshape(c, th * w)                          # channel rows, spatial lanes
    b_mean = jnp.mean(xs, axis=1, keepdims=True)       # (C, 1)
    d = xs - b_mean
    b_m2 = jnp.sum(d * d, axis=1, keepdims=True)        # (C, 1)

    @pl.when(t == 0)
    def _():
        mean_sc[...] = b_mean
        m2_sc[...] = b_m2

    @pl.when(t > 0)
    def _():
        n_a = t.astype(jnp.float32) * block_cnt
        n_b = block_cnt
        n_ab = n_a + n_b
        delta = b_mean - mean_sc[...]
        mean_sc[...] = mean_sc[...] + delta * (n_b / n_ab)
        m2_sc[...] = m2_sc[...] + b_m2 + (delta * delta) * (n_a * n_b / n_ab)

    @pl.when(t == nt - 1)
    def _():
        slice_mean = mean_sc[...]
        # PyTorch updates running_var with the UNBIASED batch variance
        # (total_cnt > 1 is asserted in the wrapper, as required by PyTorch).
        slice_var = m2_sc[...] / (total_cnt - 1.0)
        mean_mix = prior * src_mean_ref[...] + (1.0 - prior) * slice_mean
        var_mix = prior * src_var_ref[...] + (1.0 - prior) * slice_var
        scale = gamma_ref[...] * jax.lax.rsqrt(var_mix + eps)
        scale_ref[...] = scale
        shift_ref[...] = beta_ref[...] - mean_mix * scale


def _norm_kernel(x_ref, scale_ref, shift_ref, o_ref, *, tr):
    """Main pass: y = x * scale_row + shift_row (one FMA per element).

    scale/shift are fully VMEM-resident (R, 1) arrays; slice the rows for this
    block with pl.ds instead of per-block DMAs.
    """
    r0 = pl.multiple_of(pl.program_id(0) * tr, tr)
    sc = scale_ref[pl.ds(r0, tr), :]
    sh = shift_ref[pl.ds(r0, tr), :]
    x = x_ref[...].astype(jnp.float32)
    o_ref[...] = (x * sc + sh).astype(o_ref.dtype)


def bayesian_batchnorm3d_spatial(x, src_mean, src_var, gamma, beta, *,
                                 prior, eps=1e-5,
                                 block_budget_bytes=None,
                                 vmem_limit_bytes=None):
    N, C, D, H, W = x.shape
    assert D > 8, "module hard-codes the D=8 spatial slice"
    assert N * H * W > 1, "unbiased slice variance needs N*H*W > 1 (as PyTorch)"
    S = D * H * W
    R = N * C
    itemsize = x.dtype.itemsize

    # Generation-aware budgets: 128 MiB VMEM parts (v5e/v6e) take bigger tiles
    # than v7x's 64 MiB.  Working set of pass 2 ~= 4x block (x + out tiles,
    # each double-buffered) plus the tiny resident scale/shift rows.
    vmem_cap = _vmem_capacity_bytes()
    if block_budget_bytes is None:
        block_budget_bytes = (16 if vmem_cap >= 100 * 1024 * 1024 else 10) * 1024 * 1024
    if vmem_limit_bytes is None:
        vmem_limit_bytes = (80 if vmem_cap >= 100 * 1024 * 1024 else 48) * 1024 * 1024

    # ---- Pass 1: D=8 slice stats + prior mixing + affine folding -> (scale, shift)
    # Read the slice directly from x (no wrapper transpose): block is the
    # (C, th, W) slab of x[n, :, 8, h*th:(h+1)*th, :].  The slice is only 1/D
    # of the tensor, so this pass is negligible HBM traffic.
    stats_budget = 4 * 1024 * 1024
    th = _pick_tile(H, 8, max(8, stats_budget // max(C * W * itemsize, 1)))
    block_cnt = float(th * W)
    total_cnt = float(N * H * W)

    col = lambda a: a.reshape(C, 1).astype(jnp.float32)
    chan_spec = pl.BlockSpec((C, 1), lambda n, h: (0, 0))

    scale, shift = pl.pallas_call(
        functools.partial(_stats_scale_shift_kernel,
                          block_cnt=block_cnt, total_cnt=total_cnt,
                          prior=float(prior), eps=float(eps)),
        out_shape=(jax.ShapeDtypeStruct((C, 1), jnp.float32),
                   jax.ShapeDtypeStruct((C, 1), jnp.float32)),
        grid_spec=pltpu.PrefetchScalarGridSpec(
            num_scalar_prefetch=0,
            grid=(N, H // th),
            in_specs=[
                # squeeze N (grid) and D (fixed element index 8)
                pl.BlockSpec((None, C, None, th, W),
                             lambda n, h: (n, 0, 8, h, 0)),
                chan_spec, chan_spec, chan_spec, chan_spec,
            ],
            out_specs=(chan_spec, chan_spec),
            scratch_shapes=[pltpu.VMEM((C, 1), jnp.float32),
                            pltpu.VMEM((C, 1), jnp.float32)],
        ),
        compiler_params=pltpu.CompilerParams(
            dimension_semantics=("arbitrary", "arbitrary"),
            vmem_limit_bytes=vmem_limit_bytes,
        ),
    )(x, col(src_mean), col(src_var), col(gamma), col(beta))

    # ---- Pass 2: normalization over the full tensor in native NCDHW layout.
    # Free reshape to (N*C, D*H*W): row r = (n, c), lanes = spatial (lane-dense).
    x2 = x.reshape(R, S)
    # Per-row scale/shift (tiny: R*4 bytes each); row n*C + c takes channel c.
    scale_rows = jnp.tile(scale, (N, 1))        # (R, 1)
    shift_rows = jnp.tile(shift, (N, 1))        # (R, 1)

    # Grow the lane tile first (lane-dense, unmasked vst), then rows from the
    # remaining dtype-aware budget.
    if 8 * S * itemsize <= block_budget_bytes:
        ts = S
    else:
        ts = _pick_tile(S, 128, block_budget_bytes // (8 * itemsize))
    tr = _pick_tile(R, 8, max(8, block_budget_bytes // max(ts * itemsize, 1)))

    out2 = pl.pallas_call(
        functools.partial(_norm_kernel, tr=tr),
        out_shape=jax.ShapeDtypeStruct((R, S), x.dtype),
        grid_spec=pltpu.PrefetchScalarGridSpec(
            num_scalar_prefetch=0,
            grid=(R // tr, S // ts),
            in_specs=[
                pl.BlockSpec((tr, ts), lambda r, s: (r, s)),
                pl.BlockSpec((R, 1), lambda r, s: (0, 0)),   # resident, 1 DMA
                pl.BlockSpec((R, 1), lambda r, s: (0, 0)),   # resident, 1 DMA
            ],
            out_specs=pl.BlockSpec((tr, ts), lambda r, s: (r, s)),
        ),
        compiler_params=pltpu.CompilerParams(
            # Pure map: both axes independent.  On multi-TC parts the compiler
            # may shard parallel grid axes across TensorCores.
            dimension_semantics=("parallel", "parallel"),
            vmem_limit_bytes=vmem_limit_bytes,
        ),
    )(x2, scale_rows, shift_rows)

    return out2.reshape(N, C, D, H, W)


def _reference(x, src_mean, src_var, gamma, beta, prior, eps):
    """Pure-JAX reference of BayesianBatchNorm3DSpatial.forward."""
    xs = x[:, :, 8].astype(jnp.float32)
    m = xs.shape[0] * xs.shape[2] * xs.shape[3]
    b_mean = jnp.mean(xs, axis=(0, 2, 3))
    b_var = jnp.sum((xs - b_mean.reshape(1, -1, 1, 1)) ** 2, axis=(0, 2, 3)) / (m - 1)
    mean = prior * src_mean + (1.0 - prior) * b_mean
    var = prior * src_var + (1.0 - prior) * b_var
    r = lambda a: a.reshape(1, -1, 1, 1, 1)
    xf = x.astype(jnp.float32)
    return (xf - r(mean)) / jnp.sqrt(r(var) + eps) * r(gamma) + r(beta)


if __name__ == "__main__":
    key = jax.random.PRNGKey(0)
    kx, km, kv, kg, kb = jax.random.split(key, 5)

    # BatchNorm3d-shaped input (N, C, D, H, W); D must exceed 8.
    N, C, D, H, W = 2, 4, 12, 16, 16
    prior = 0.7
    eps = 1e-5

    x = jax.random.normal(kx, (N, C, D, H, W), dtype=jnp.float32) * 2.0 + 0.5
    # Source ("prior") running stats + affine params of the wrapped BatchNorm3d.
    src_mean = jax.random.normal(km, (C,), dtype=jnp.float32) * 0.3
    src_var = jax.random.uniform(kv, (C,), dtype=jnp.float32, minval=0.5, maxval=1.5)
    gamma = jax.random.normal(kg, (C,), dtype=jnp.float32) * 0.5 + 1.0
    beta = jax.random.normal(kb, (C,), dtype=jnp.float32) * 0.1

    out = bayesian_batchnorm3d_spatial(x, src_mean, src_var, gamma, beta,
                                       prior=prior, eps=eps)
    out = jax.block_until_ready(out)

    ref = _reference(x, src_mean, src_var, gamma, beta, prior, eps)
    assert out.shape == x.shape and out.dtype == x.dtype
    err = jnp.max(jnp.abs(out - ref))
    assert err < 1e-4, f"mismatch vs pure-JAX reference: {err}"

    print("KERNEL_OK")
</pallas_src>

<mosaic_0001>
module attributes {stable_mosaic.version = 11 : i64} {
  func.func @_stats_scale_shift_kernel(%arg0: i32, %arg1: i32, %arg2: memref<1x4x1x16x16xf32, #tpu.memory_space<vmem>>, %arg3: memref<4x1xf32, #tpu.memory_space<vmem>>, %arg4: memref<4x1xf32, #tpu.memory_space<vmem>>, %arg5: memref<4x1xf32, #tpu.memory_space<vmem>>, %arg6: memref<4x1xf32, #tpu.memory_space<vmem>>, %arg7: memref<4x1xf32, #tpu.memory_space<vmem>>, %arg8: memref<4x1xf32, #tpu.memory_space<vmem>>, %arg9: memref<4x1xf32, #tpu.memory_space<vmem>>, %arg10: memref<4x1xf32, #tpu.memory_space<vmem>>) attributes {dimension_semantics = [#tpu.dimension_semantics<arbitrary>, #tpu.dimension_semantics<arbitrary>], iteration_bounds = array<i64: 2, 1>, scalar_prefetch = 0 : i64, scratch_operands = 2 : i64, tpu.core_type = #tpu.core_type<tc>, window_params = [{transform_indices = @transform_0, window_bounds = array<i64: 1, 4, 1, 16, 16>}, {pipeline_mode = #tpu.pipeline_mode<synchronous>, transform_indices = @transform_1, window_bounds = array<i64: 4, 1>}, {pipeline_mode = #tpu.pipeline_mode<synchronous>, transform_indices = @transform_2, window_bounds = array<i64: 4, 1>}, {pipeline_mode = #tpu.pipeline_mode<synchronous>, transform_indices = @transform_3, window_bounds = array<i64: 4, 1>}, {pipeline_mode = #tpu.pipeline_mode<synchronous>, transform_indices = @transform_4, window_bounds = array<i64: 4, 1>}, {pipeline_mode = #tpu.pipeline_mode<synchronous>, transform_indices = @transform_5, window_bounds = array<i64: 4, 1>}, {pipeline_mode = #tpu.pipeline_mode<synchronous>, transform_indices = @transform_6, window_bounds = array<i64: 4, 1>}]} {
    %c1_i32 = arith.constant 1 : i32
    %0 = arith.muli %arg0, %c1_i32 : i32
    %1 = arith.addi %0, %arg1 : i32
    %c0 = arith.constant 0 : index
    %c0_0 = arith.constant 0 : index
    %c0_1 = arith.constant 0 : index
    %c0_2 = arith.constant 0 : index
    %c0_3 = arith.constant 0 : index
    %2 = vector.load %arg2[%c0, %c0_0, %c0_1, %c0_2, %c0_3] : memref<1x4x1x16x16xf32, #tpu.memory_space<vmem>>, vector<1x4x1x16x16xf32>
    %3 = vector.shape_cast %2 : vector<1x4x1x16x16xf32> to vector<4x16x16xf32>
    %4 = vector.shape_cast %3 : vector<4x16x16xf32> to vector<4x256xf32>
    %cst = arith.constant dense<0.000000e+00> : vector<4xf32>
    %5 = vector.multi_reduction <add>, %4, %cst [1] : vector<4x256xf32> to vector<4xf32>
    %6 = vector.shape_cast %5 : vector<4xf32> to vector<4x1xf32>
    %cst_4 = arith.constant 2.560000e+02 : f32
    %7 = vector.broadcast %cst_4 : f32 to vector<4x1xf32>
    %8 = arith.divf %6, %7 : vector<4x1xf32>
    %9 = vector.broadcast %8 : vector<4x1xf32> to vector<4x256xf32>
    %10 = arith.subf %4, %9 : vector<4x256xf32>
    %11 = arith.mulf %10, %10 : vector<4x256xf32>
    %cst_5 = arith.constant dense<0.000000e+00> : vector<4xf32>
    %12 = vector.multi_reduction <add>, %11, %cst_5 [1] : vector<4x256xf32> to vector<4xf32>
    %13 = vector.shape_cast %12 : vector<4xf32> to vector<4x1xf32>
    %c0_i32 = arith.constant 0 : i32
    %14 = arith.cmpi eq, %1, %c0_i32 : i32
    %15 = arith.extui %14 : i1 to i32
    %c0_i32_6 = arith.constant 0 : i32
    %16 = arith.cmpi ne, %15, %c0_i32_6 : i32
    scf.if %16 {
      %c0_11 = arith.constant 0 : index
      %c0_12 = arith.constant 0 : index
      %23 = vector.load %arg9[%c0_11, %c0_12] : memref<4x1xf32, #tpu.memory_space<vmem>>, vector<4x1xf32>
      tpu.vector_store %arg9[%c0_11, %c0_12], %8 {strides = array<i32>} : memref<4x1xf32, #tpu.memory_space<vmem>>, vector<4x1xf32>,
      %c0_13 = arith.constant 0 : index
      %c0_14 = arith.constant 0 : index
      %24 = vector.load %arg10[%c0_13, %c0_14] : memref<4x1xf32, #tpu.memory_space<vmem>>, vector<4x1xf32>
      tpu.vector_store %arg10[%c0_13, %c0_14], %13 {strides = array<i32>} : memref<4x1xf32, #tpu.memory_space<vmem>>, vector<4x1xf32>,
    } else {
    }
    %c0_i32_7 = arith.constant 0 : i32
    %17 = arith.cmpi sgt, %1, %c0_i32_7 : i32
    %18 = arith.extui %17 : i1 to i32
    %c0_i32_8 = arith.constant 0 : i32
    %19 = arith.cmpi ne, %18, %c0_i32_8 : i32
    scf.if %19 {
      %23 = arith.sitofp %1 : i32 to f32
      %cst_11 = arith.constant 2.560000e+02 : f32
      %24 = arith.mulf %23, %cst_11 : f32
      %cst_12 = arith.constant 2.560000e+02 : f32
      %25 = arith.addf %24, %cst_12 : f32
      %c0_13 = arith.constant 0 : index
      %c0_14 = arith.constant 0 : index
      %26 = vector.load %arg9[%c0_13, %c0_14] : memref<4x1xf32, #tpu.memory_space<vmem>>, vector<4x1xf32>
      %27 = arith.subf %8, %26 : vector<4x1xf32>
      %c0_15 = arith.constant 0 : index
      %c0_16 = arith.constant 0 : index
      %28 = vector.load %arg9[%c0_15, %c0_16] : memref<4x1xf32, #tpu.memory_space<vmem>>, vector<4x1xf32>
      %cst_17 = arith.constant 2.560000e+02 : f32
      %29 = arith.divf %cst_17, %25 : f32
      %30 = vector.broadcast %29 : f32 to vector<4x1xf32>
      %31 = arith.mulf %27, %30 : vector<4x1xf32>
      %32 = arith.addf %28, %31 : vector<4x1xf32>
      %c0_18 = arith.constant 0 : index
      %c0_19 = arith.constant 0 : index
      %33 = vector.load %arg9[%c0_18, %c0_19] : memref<4x1xf32, #tpu.memory_space<vmem>>, vector<4x1xf32>
      tpu.vector_store %arg9[%c0_18, %c0_19], %32 {strides = array<i32>} : memref<4x1xf32, #tpu.memory_space<vmem>>, vector<4x1xf32>,
      %c0_20 = arith.constant 0 : index
      %c0_21 = arith.constant 0 : index
      %34 = vector.load %arg10[%c0_20, %c0_21] : memref<4x1xf32, #tpu.memory_space<vmem>>, vector<4x1xf32>
      %35 = arith.addf %34, %13 : vector<4x1xf32>
      %36 = arith.mulf %27, %27 : vector<4x1xf32>
      %cst_22 = arith.constant 2.560000e+02 : f32
      %37 = arith.mulf %24, %cst_22 : f32
      %38 = arith.divf %37, %25 : f32
      %39 = vector.broadcast %38 : f32 to vector<4x1xf32>
      %40 = arith.mulf %36, %39 : vector<4x1xf32>
      %41 = arith.addf %35, %40 : vector<4x1xf32>
      %c0_23 = arith.constant 0 : index
      %c0_24 = arith.constant 0 : index
      %42 = vector.load %arg10[%c0_23, %c0_24] : memref<4x1xf32, #tpu.memory_space<vmem>>, vector<4x1xf32>
      tpu.vector_store %arg10[%c0_23, %c0_24], %41 {strides = array<i32>} : memref<4x1xf32, #tpu.memory_space<vmem>>, vector<4x1xf32>,
    } else {
    }
    %c1_i32_9 = arith.constant 1 : i32
    %20 = arith.cmpi eq, %1, %c1_i32_9 : i32
    %21 = arith.extui %20 : i1 to i32
    %c0_i32_10 = arith.constant 0 : i32
    %22 = arith.cmpi ne, %21, %c0_i32_10 : i32
    scf.if %22 {
      %c0_11 = arith.constant 0 : index
      %c0_12 = arith.constant 0 : index
      %23 = vector.load %arg9[%c0_11, %c0_12] : memref<4x1xf32, #tpu.memory_space<vmem>>, vector<4x1xf32>
      %c0_13 = arith.constant 0 : index
      %c0_14 = arith.constant 0 : index
      %24 = vector.load %arg10[%c0_13, %c0_14] : memref<4x1xf32, #tpu.memory_space<vmem>>, vector<4x1xf32>
      %cst_15 = arith.constant 5.110000e+02 : f32
      %25 = vector.broadcast %cst_15 : f32 to vector<4x1xf32>
      %26 = arith.divf %24, %25 : vector<4x1xf32>
      %c0_16 = arith.constant 0 : index
      %c0_17 = arith.constant 0 : index
      %27 = vector.load %arg3[%c0_16, %c0_17] : memref<4x1xf32, #tpu.memory_space<vmem>>, vector<4x1xf32>
      %cst_18 = arith.constant 0.699999988 : f32
      %28 = vector.broadcast %cst_18 : f32 to vector<4x1xf32>
      %29 = arith.mulf %28, %27 : vector<4x1xf32>
      %cst_19 = arith.constant 3.000000e-01 : f32
      %30 = vector.broadcast %cst_19 : f32 to vector<4x1xf32>
      %31 = arith.mulf %30, %23 : vector<4x1xf32>
      %32 = arith.addf %29, %31 : vector<4x1xf32>
      %c0_20 = arith.constant 0 : index
      %c0_21 = arith.constant 0 : index
      %33 = vector.load %arg4[%c0_20, %c0_21] : memref<4x1xf32, #tpu.memory_space<vmem>>, vector<4x1xf32>
      %cst_22 = arith.constant 0.699999988 : f32
      %34 = vector.broadcast %cst_22 : f32 to vector<4x1xf32>
      %35 = arith.mulf %34, %33 : vector<4x1xf32>
      %cst_23 = arith.constant 3.000000e-01 : f32
      %36 = vector.broadcast %cst_23 : f32 to vector<4x1xf32>
      %37 = arith.mulf %36, %26 : vector<4x1xf32>
      %38 = arith.addf %35, %37 : vector<4x1xf32>
      %c0_24 = arith.constant 0 : index
      %c0_25 = arith.constant 0 : index
      %39 = vector.load %arg5[%c0_24, %c0_25] : memref<4x1xf32, #tpu.memory_space<vmem>>, vector<4x1xf32>
      %cst_26 = arith.constant 9.99999974E-6 : f32
      %40 = vector.broadcast %cst_26 : f32 to vector<4x1xf32>
      %41 = arith.addf %38, %40 : vector<4x1xf32>
      %42 = math.rsqrt %41 : vector<4x1xf32>
      %43 = arith.mulf %39, %42 : vector<4x1xf32>
      %c0_27 = arith.constant 0 : index
      %c0_28 = arith.constant 0 : index
      %44 = vector.load %arg7[%c0_27, %c0_28] : memref<4x1xf32, #tpu.memory_space<vmem>>, vector<4x1xf32>
      tpu.vector_store %arg7[%c0_27, %c0_28], %43 {strides = array<i32>} : memref<4x1xf32, #tpu.memory_space<vmem>>, vector<4x1xf32>,
      %c0_29 = arith.constant 0 : index
      %c0_30 = arith.constant 0 : index
      %45 = vector.load %arg6[%c0_29, %c0_30] : memref<4x1xf32, #tpu.memory_space<vmem>>, vector<4x1xf32>
      %46 = arith.mulf %32, %43 : vector<4x1xf32>
      %47 = arith.subf %45, %46 : vector<4x1xf32>
      %c0_31 = arith.constant 0 : index
      %c0_32 = arith.constant 0 : index
      %48 = vector.load %arg8[%c0_31, %c0_32] : memref<4x1xf32, #tpu.memory_space<vmem>>, vector<4x1xf32>
      tpu.vector_store %arg8[%c0_31, %c0_32], %47 {strides = array<i32>} : memref<4x1xf32, #tpu.memory_space<vmem>>, vector<4x1xf32>,
    } else {
    }
    return
  }
  func.func @transform_0(%arg0: i32, %arg1: i32) -> (i32, i32, i32, i32, i32) {
    %c0_i32 = arith.constant 0 : i32
    %c8_i32 = arith.constant 8 : i32
    %c0_i32_0 = arith.constant 0 : i32
    %c0_i32_1 = arith.constant 0 : i32
    return %arg0, %c0_i32, %c8_i32, %arg1, %c0_i32_0 : i32, i32, i32, i32, i32
  }
  func.func @transform_1(%arg0: i32, %arg1: i32) -> (i32, i32) {
    %c0_i32 = arith.constant 0 : i32
    %c0_i32_0 = arith.constant 0 : i32
    %c0_i32_1 = arith.constant 0 : i32
    return %c0_i32, %c0_i32_0 : i32, i32
  }
  func.func @transform_2(%arg0: i32, %arg1: i32) -> (i32, i32) {
    %c0_i32 = arith.constant 0 : i32
    %c0_i32_0 = arith.constant 0 : i32
    %c0_i32_1 = arith.constant 0 : i32
    return %c0_i32, %c0_i32_0 : i32, i32
  }
  func.func @transform_3(%arg0: i32, %arg1: i32) -> (i32, i32) {
    %c0_i32 = arith.constant 0 : i32
    %c0_i32_0 = arith.constant 0 : i32
    %c0_i32_1 = arith.constant 0 : i32
    return %c0_i32, %c0_i32_0 : i32, i32
  }
  func.func @transform_4(%arg0: i32, %arg1: i32) -> (i32, i32) {
    %c0_i32 = arith.constant 0 : i32
    %c0_i32_0 = arith.constant 0 : i32
    %c0_i32_1 = arith.constant 0 : i32
    return %c0_i32, %c0_i32_0 : i32, i32
  }
  func.func @transform_5(%arg0: i32, %arg1: i32) -> (i32, i32) {
    %c0_i32 = arith.constant 0 : i32
    %c0_i32_0 = arith.constant 0 : i32
    %c0_i32_1 = arith.constant 0 : i32
    return %c0_i32, %c0_i32_0 : i32, i32
  }
  func.func @transform_6(%arg0: i32, %arg1: i32) -> (i32, i32) {
    %c0_i32 = arith.constant 0 : i32
    %c0_i32_0 = arith.constant 0 : i32
    %c0_i32_1 = arith.constant 0 : i32
    return %c0_i32, %c0_i32_0 : i32, i32
  }
}

</mosaic_0001>

<llo_original>
// kernel: tpu_custom_call.1
$region0: #{tpu_custom_call.1}
  #allocation0 [shape = 'u32[]', space=smem, size = 0x4, offset = 0x4, fixed_abs, tag = 'smem constant byte address 0x4 - core index']
  #allocation1 [shape = 'u32[144,128]{1,0:T(1,128)}', space=vmem, size = 0x12000, scoped, tag = 'internal scratch']
  #allocation2 [shape = 'f32[4,1]{1,0:T(4,128)}', space=vmem, size = 0x800, scoped, tag = 'scratch operand']
  #allocation3 [shape = 'f32[4,1]{1,0:T(4,128)}', space=vmem, size = 0x800, scoped, tag = 'scratch operand']
  #allocation6 [shape = 's32[]', space=sflag, size = 0x4, offset = 0, fixed_abs, tag = 'sflag constant byte address 0x0 - dummy sync flag']
  %s0 = inlined_call_operand.hbm [shape: f32[2,4,12,16,16], index: 0, kind: input, shape index: {}]
  %s1 = inlined_call_operand.vmem [shape: f32[4,1], index: 1, kind: input, shape index: {}]
  %s2 = inlined_call_operand.vmem [shape: f32[4,1], index: 2, kind: input, shape index: {}]
  %s3 = inlined_call_operand.vmem [shape: f32[4,1], index: 3, kind: input, shape index: {}]
  %s4 = inlined_call_operand.vmem [shape: f32[4,1], index: 4, kind: input, shape index: {}]
  %s5 = inlined_call_operand.vmem [shape: f32[4,1], index: 5, kind: output, shape index: {0}]
  %s6 = inlined_call_operand.vmem [shape: f32[4,1], index: 6, kind: output, shape index: {1}]
  %7 = xla_tuple %s5, %s6
  %s8 = sld [smem:[#allocation0]]
  $region77: #{tpu_custom_call.1} parent=0
    _
  %s10 = ssub.s32 1, %s8
  %s11 = scalar_select 0, %s10, %s8
  $region1: #{tpu_custom_call.1} parent=0
    #allocation4 [shape = 'u8[65536]{0}', space=vmem, size = 0x10000, scoped, tag = 'input window, operand 0']
    #allocation5 [shape = 's32[2]{0}', space=sflag, size = 0x8, scoped, tag = 'scoped memory for tpu_custom_call.1']
    %12 = vsyncpa [#allocation5], 0
    %s13 = scalar_lea.sflag [#allocation5], 1
    %14 = vsyncpa %s13, 0
    loop: start=0, step=1, limit=4
    $region2: #{tpu_custom_call.1} parent=1 // loop_pre_header
      _
    $region3: #{tpu_custom_call.1} parent=1 // loop_header
      %s16 = sphi 0, %s20
      %p17 = scmp.ge.s32.totalorder %s16, 4
      %s23 = sphi 0, %s35
      %s24 = sphi 0, %s31
      %s25 = sphi 0, %s23
      %s26 = sphi 0, %s24
      %s27 = sphi 0, %s25
      %s28 = sphi 0, %s26
      %s40 = sphi 0, %s42
      %s43 = sphi 0, %s40
      %s44 = sphi 0, %s43
      %s60 = sphi 0, %s44
      %s64 = sphi 0, %s64
      %s66 = sphi 0, %s64
      %s67 = sphi 0, %s66
      %s81 = sphi 0, %s67
      %s85 = sphi 0, %s85
      %s87 = sphi 0, %s85
      %s88 = sphi 0, %s87
      %s102 = sphi 0, %s88
      %s106 = sphi 0, %s106
      %s108 = sphi 0, %s106
      %s109 = sphi 0, %s108
      %s123 = sphi 0, %s109
      %s127 = sphi 0, %s127
      %s129 = sphi 0, %s127
      %s130 = sphi 0, %s129
      %s144 = sphi 0, %s130
      %s148 = sphi 0, %s148
      %s150 = sphi 0, %s148
      %s151 = sphi 0, %s150
      %s165 = sphi 0, %s151
      %s169 = sphi 0, %s169
      %s171 = sphi 0, %s169
      %s172 = sphi 0, %s171
      %s186 = sphi 0, %s172
    $region4: #{tpu_custom_call.1} parent=1 // loop_header_branch
      %19 = sbr.rel (%p17) target = $region8
    $region5: #{tpu_custom_call.1} parent=1 // loop_body
      %s21 = ssub.s32 %s16, 1
      %s22 = ssub.s32 %s16, 2
      %s29 = sadd.s32 1, %s24
      %p30 = scmp.ge.s32.totalorder %s29, 1
      %s31 = scalar_select %p30, 0, %s29
      %s32 = sadd.s32 1, %s23
      %s33 = scalar_select %p30, %s32, %s23
      %p34 = scmp.ge.s32.totalorder %s33, 2
      %s35 = scalar_select %p34, 0, %s33
      %s36 = ssub.s32 %s23, %s35
      %s37 = ssub.s32 %s24, %s31
      %s38 = sor.u32 %s36, %s37
      %p39 = scmp.eq.s32.totalorder %s38, 0
      %s41 = sadd.s32 %s40, 1
      %s42 = scalar_select %p39, %s40, %s41
      %p45 = pneg %p39
      %p46 = scmp.eq.s32.totalorder %s16, 1
      %p47 = por %p45, %p46
      %p48 = scmp.ne.s32.totalorder %s40, %s43
      %p49 = scmp.eq.s32.totalorder %s16, 0
      %p50 = por %p48, %p49
      %p51 = scmp.ne.s32.totalorder %s40, %s43
      %p52 = scmp.eq.s32.totalorder %s21, 1
      %p53 = por %p51, %p52
      %p54 = scmp.ne.s32.totalorder %s43, %s44
      %p55 = scmp.eq.s32.totalorder %s21, 0
      %p56 = por %p54, %p55
      %p57 = scmp.ne.s32.totalorder %s43, %s44
      %p58 = scmp.eq.s32.totalorder %s22, 1
      %p59 = por %p57, %p58
      %p61 = scmp.ne.s32.totalorder %s44, %s60
      %p62 = scmp.eq.s32.totalorder %s22, 0
      %p63 = por %p61, %p62
      %s65 = sadd.s32 %s64, 1
      %p68 = scmp.eq.s32.totalorder %s16, 1
      %p69 = scmp.ne.s32.totalorder %s64, %s66
      %p70 = scmp.eq.s32.totalorder %s16, 0
      %p71 = por %p69, %p70
      %p72 = scmp.ne.s32.totalorder %s64, %s66
      %p73 = scmp.eq.s32.totalorder %s21, 1
      %p74 = por %p72, %p73
      %p75 = scmp.ne.s32.totalorder %s66, %s67
      %p76 = scmp.eq.s32.totalorder %s21, 0
      %p77 = por %p75, %p76
      %p78 = scmp.ne.s32.totalorder %s66, %s67
      %p79 = scmp.eq.s32.totalorder %s22, 1
      %p80 = por %p78, %p79
      %p82 = scmp.ne.s32.totalorder %s67, %s81
      %p83 = scmp.eq.s32.totalorder %s22, 0
      %p84 = por %p82, %p83
      %s86 = sadd.s32 %s85, 1
      %p89 = scmp.eq.s32.totalorder %s16, 1
      %p90 = scmp.ne.s32.totalorder %s85, %s87
      %p91 = scmp.eq.s32.totalorder %s16, 0
      %p92 = por %p90, %p91
      %p93 = scmp.ne.s32.totalorder %s85, %s87
      %p94 = scmp.eq.s32.totalorder %s21, 1
      %p95 = por %p93, %p94
      %p96 = scmp.ne.s32.totalorder %s87, %s88
      %p97 = scmp.eq.s32.totalorder %s21, 0
      %p98 = por %p96, %p97
      %p99 = scmp.ne.s32.totalorder %s87, %s88
      %p100 = scmp.eq.s32.totalorder %s22, 1
      %p101 = por %p99, %p100
      %p103 = scmp.ne.s32.totalorder %s88, %s102
      %p104 = scmp.eq.s32.totalorder %s22, 0
      %p105 = por %p103, %p104
      %s107 = sadd.s32 %s106, 1
      %p110 = scmp.eq.s32.totalorder %s16, 1
      %p111 = scmp.ne.s32.totalorder %s106, %s108
      %p112 = scmp.eq.s32.totalorder %s16, 0
      %p113 = por %p111, %p112
      %p114 = scmp.ne.s32.totalorder %s106, %s108
      %p115 = scmp.eq.s32.totalorder %s21, 1
      %p116 = por %p114, %p115
      %p117 = scmp.ne.s32.totalorder %s108, %s109
      %p118 = scmp.eq.s32.totalorder %s21, 0
      %p119 = por %p117, %p118
      %p120 = scmp.ne.s32.totalorder %s108, %s109
      %p121 = scmp.eq.s32.totalorder %s22, 1
      %p122 = por %p120, %p121
      %p124 = scmp.ne.s32.totalorder %s109, %s123
      %p125 = scmp.eq.s32.totalorder %s22, 0
      %p126 = por %p124, %p125
      %s128 = sadd.s32 %s127, 1
      %p131 = scmp.eq.s32.totalorder %s16, 1
      %p132 = scmp.ne.s32.totalorder %s127, %s129
      %p133 = scmp.eq.s32.totalorder %s16, 0
      %p134 = por %p132, %p133
      %p135 = scmp.ne.s32.totalorder %s127, %s129
      %p136 = scmp.eq.s32.totalorder %s21, 1
      %p137 = por %p135, %p136
      %p138 = scmp.ne.s32.totalorder %s129, %s130
      %p139 = scmp.eq.s32.totalorder %s21, 0
      %p140 = por %p138, %p139
      %p141 = scmp.ne.s32.totalorder %s129, %s130
      %p142 = scmp.eq.s32.totalorder %s22, 1
      %p143 = por %p141, %p142
      %p145 = scmp.ne.s32.totalorder %s130, %s144
      %p146 = scmp.eq.s32.totalorder %s22, 0
      %p147 = por %p145, %p146
      %s149 = sadd.s32 %s148, 1
      %p152 = scmp.eq.s32.totalorder %s16, 1
      %p153 = scmp.ne.s32.totalorder %s148, %s150
      %p154 = scmp.eq.s32.totalorder %s16, 0
      %p155 = por %p153, %p154
      %p156 = scmp.ne.s32.totalorder %s148, %s150
      %p157 = scmp.eq.s32.totalorder %s21, 1
      %p158 = por %p156, %p157
      %p159 = scmp.ne.s32.totalorder %s150, %s151
      %p160 = scmp.eq.s32.totalorder %s21, 0
      %p161 = por %p159, %p160
      %p162 = scmp.ne.s32.totalorder %s150, %s151
      %p163 = scmp.eq.s32.totalorder %s22, 1
      %p164 = por %p162, %p163
      %p166 = scmp.ne.s32.totalorder %s151, %s165
      %p167 = scmp.eq.s32.totalorder %s22, 0
      %p168 = por %p166, %p167
      %s170 = sadd.s32 %s169, 1
      %p173 = scmp.eq.s32.totalorder %s16, 1
      %p174 = scmp.ne.s32.totalorder %s169, %s171
      %p175 = scmp.eq.s32.totalorder %s16, 0
      %p176 = por %p174, %p175
      %p177 = scmp.ne.s32.totalorder %s169, %s171
      %p178 = scmp.eq.s32.totalorder %s21, 1
      %p179 = por %p177, %p178
      %p180 = scmp.ne.s32.totalorder %s171, %s172
      %p181 = scmp.eq.s32.totalorder %s21, 0
      %p182 = por %p180, %p181
      %p183 = scmp.ne.s32.totalorder %s171, %s172
      %p184 = scmp.eq.s32.totalorder %s22, 1
      %p185 = por %p183, %p184
      %p187 = scmp.ne.s32.totalorder %s172, %s186
      %p188 = scmp.eq.s32.totalorder %s22, 0
      %p189 = por %p187, %p188
      %p190 = scmp.le.s32.totalorder 1, %s16
      %p191 = scmp.lt.s32.totalorder %s16, 3
      %p192 = pnand %p190, %p191
      %p193 = pneg %p192
      // Predicated region
      $region9: #{tpu_custom_call.1} parent=5 // pred_check
        _
      $region10: #{tpu_custom_call.1} parent=5 // pred_check_branch
        %195 = sbr.rel (%p192) target = $region12
      $region11: #{tpu_custom_call.1} parent=5 // pred_region
        %s196 = ssub.s32 %s16, 1
        // Predicated region
        $region13: #{tpu_custom_call.1} parent=11 // pred_check
          %p197 = pneg %p77
        $region14: #{tpu_custom_call.1} parent=11 // pred_check_branch
          %199 = sbr.rel (%p197) target = $region16
        $region15: #{tpu_custom_call.1} parent=11 // pred_region
          _
        $region16: #{tpu_custom_call.1} parent=11 // pred_fallthru
          _
        // Predicated region
        $region17: #{tpu_custom_call.1} parent=11 // pred_check
          %p200 = pneg %p98
        $region18: #{tpu_custom_call.1} parent=11 // pred_check_branch
          %202 = sbr.rel (%p200) target = $region20
        $region19: #{tpu_custom_call.1} parent=11 // pred_region
          _
        $region20: #{tpu_custom_call.1} parent=11 // pred_fallthru
          _
        // Predicated region
        $region21: #{tpu_custom_call.1} parent=11 // pred_check
          %p203 = pneg %p119
        $region22: #{tpu_custom_call.1} parent=11 // pred_check_branch
          %205 = sbr.rel (%p203) target = $region24
        $region23: #{tpu_custom_call.1} parent=11 // pred_region
          _
        $region24: #{tpu_custom_call.1} parent=11 // pred_fallthru
          _
        // Predicated region
        $region25: #{tpu_custom_call.1} parent=11 // pred_check
          %p206 = pneg %p140
        $region26: #{tpu_custom_call.1} parent=11 // pred_check_branch
          %208 = sbr.rel (%p206) target = $region28
        $region27: #{tpu_custom_call.1} parent=11 // pred_region
          _
        $region28: #{tpu_custom_call.1} parent=11 // pred_fallthru
          _
      $region12: #{tpu_custom_call.1} parent=5 // pred_fallthru
        _
      %p209 = scmp.lt.s32.totalorder %s16, 2
      // Predicated region
      $region29: #{tpu_custom_call.1} parent=5 // pred_check
        %p210 = pneg %p209
      $region30: #{tpu_custom_call.1} parent=5 // pred_check_branch
        %212 = sbr.rel (%p210) target = $region32
      $region31: #{tpu_custom_call.1} parent=5 // pred_region
        // Predicated region
        $region33: #{tpu_custom_call.1} parent=31 // pred_check
          %p213 = pneg %p50
        $region34: #{tpu_custom_call.1} parent=31 // pred_check_branch
          %215 = sbr.rel (%p213) target = $region36
        $region35: #{tpu_custom_call.1} parent=31 // pred_region
          #allocation7 [shape = 'u32[6]{0}', space=smem, size = 0x18, scoped, tag = 'DMA stride descriptor']
          %s216 = sand.u32 %s40, 1
          %s217 = scalar_lea.sflag [#allocation5], %s216
          %s218 = sand.u32 %s40, 1
          %s219 = smul.addr %s218, 64
          %s220 = scalar_lea.vmem [#allocation4], %s219
          %s221 = smul.u32 2, %s24
          %s223 = ssub.s32 1024, 1024
          %224 = vsyncadd %s217, %s223
          %s225 = sadd.s32 %s221, 16
          %s226 = smul.addr %s23, 96
          %s227 = sadd.s32 %s225, %s226
          %s228 = smul.addr %s227, 128
          %s229 = scalar_lea.hbm %s0, %s228
          %s231 = sshll.u32 1, 14
          %s232 = sxor.u32 4294967295, %s231
          %s234 = sld [smem:[#allocation0]]
          %s235 = sadd.s32 2, %s234
          %s237 = sshll.u32 7, 26
          %s238 = sxor.u32 4294967295, %s237
          %s239 = sand.u32 0, %s238
          %s240 = sshll.u32 %s235, 26
          %s241 = sor.u32 %s239, %s240
          %s242 = sshll.u32 %s220, 4
          %s243 = int_to_ptr.vmem [resolvable:$true] %s242
          %249 = sst [smem:[#allocation7]] 3072
          %s250 = scalar_lea.smem [#allocation7], 1
          %251 = sst [smem:[%s250]] 256
          %s252 = scalar_lea.smem [#allocation7], 2
          %253 = sst [smem:[%s252]] 2
          %s254 = scalar_lea.smem [#allocation7], 3
          %255 = sst [smem:[%s254]] 128
          %s256 = scalar_lea.smem [#allocation7], 4
          %257 = sst [smem:[%s256]] 128
          %s258 = scalar_lea.smem [#allocation7], 5
          %259 = sst [smem:[%s258]] 8
          %261 = dma.general %s229, 1024, %s243, %s217, [#allocation6], [#allocation7], %s241, 0
        $region36: #{tpu_custom_call.1} parent=31 // pred_fallthru
          _
      $region32: #{tpu_custom_call.1} parent=5 // pred_fallthru
        _
      %p262 = scmp.le.s32.totalorder 1, %s16
      %p263 = scmp.lt.s32.totalorder %s16, 3
      %p264 = pnand %p262, %p263
      %p265 = pneg %p264
      // Predicated region
      $region37: #{tpu_custom_call.1} parent=5 // pred_check
        _
      $region38: #{tpu_custom_call.1} parent=5 // pred_check_branch
        %267 = sbr.rel (%p264) target = $region40
      $region39: #{tpu_custom_call.1} parent=5 // pred_region
        %s268 = ssub.s32 %s16, 1
        %s269 = sand.u32 %s43, 1
        %s270 = scalar_lea.sflag [#allocation5], %s269
        %s271 = sand.u32 %s43, 1
        %s272 = smul.addr %s271, 64
        %s273 = scalar_lea.vmem [#allocation4], %s272
        // Predicated region
        $region41: #{tpu_custom_call.1} parent=39 // pred_check
          %p274 = pneg %p56
        $region42: #{tpu_custom_call.1} parent=39 // pred_check_branch
          %276 = sbr.rel (%p274) target = $region44
        $region43: #{tpu_custom_call.1} parent=39 // pred_region
          %277 = dma.done %s270, 1024
        $region44: #{tpu_custom_call.1} parent=39 // pred_fallthru
          _
        %s278 = sand.u32 %s43, 1
        %s279 = scalar_lea.sflag [#allocation5], %s278
        %s280 = sand.u32 %s43, 1
        %s281 = smul.addr %s280, 64
        %s282 = scalar_lea.vmem [#allocation4], %s281
        %p283 = pneg %p56
        %p284 = pneg %p53
        %p285 = pneg %p77
        %p286 = pneg %p74
        %p287 = pneg %p98
        %p288 = pneg %p95
        %p289 = pneg %p119
        %p290 = pneg %p116
        %p291 = pneg %p140
        %p292 = pneg %p137
        %p293 = pneg %p161
        %p294 = pneg %p158
        %p295 = pneg %p182
        %p296 = pneg %p179
        %s297 = smul.u32 2, %s26
        %s298 = sadd.s32 %s25, %s26
        %v299 = vld [vmem:[%s273] sm:$0xff]
        %v300 = vld [vmem:[%s273 + $0x8] sm:$0xff]
        %v301 = vld [vmem:[%s273 + $0x10] sm:$0xff]
        %v302 = vld [vmem:[%s273 + $0x18] sm:$0xff]
        %v303 = vld [vmem:[%s273 + $0x20] sm:$0xff]
        %v304 = vld [vmem:[%s273 + $0x28] sm:$0xff]
        %v305 = vld [vmem:[%s273 + $0x30] sm:$0xff]
        %v306 = vld [vmem:[%s273 + $0x38] sm:$0xff]
        %v307 = vcombine.low %v299, %v303
        %v308 = vcombine.high %v299, %v303
        %v310 = vunpack.c.l.s4 1983009808
        %v311 = vunpack.c.0.s8 %v310
        %v312 = vlaneseq
        %v313 = vshrl.u32 %v312, 7
        %v314 = vsub.s32 %v311, %v313
        %v315 = vrot.slane %v307, %v314
        %v317 = vunpack.c.l.s4 1983009808
        %v318 = vunpack.c.0.s8 %v317
        %v319 = vlaneseq
        %v320 = vshrl.u32 %v319, 7
        %v321 = vsub.s32 %v318, %v320
        %v322 = vrot.slane %v308, %v321
        %v323 = vcombine.low %v301, %v305
        %v324 = vcombine.high %v301, %v305
        %v326 = vunpack.c.l.s4 1983009808
        %v327 = vunpack.c.0.s8 %v326
        %v328 = vlaneseq
        %v329 = vshrl.u32 %v328, 7
        %v330 = vsub.s32 %v327, %v329
        %v331 = vrot.slane %v323, %v330
        %v333 = vunpack.c.l.s4 1983009808
        %v334 = vunpack.c.0.s8 %v333
        %v335 = vlaneseq
        %v336 = vshrl.u32 %v335, 7
        %v337 = vsub.s32 %v334, %v336
        %v338 = vrot.slane %v324, %v337
        %v339 = vcombine.low %v315, %v331
        %v340 = vcombine.high %v315, %v331
        %v342 = vunpack.c.l.s4 1934713408
        %v343 = vunpack.c.0.s8 %v342
        %v344 = vlaneseq
        %v345 = vshrl.u32 %v344, 7
        %v346 = vsub.s32 %v343, %v345
        %v347 = vrot.slane %v339, %v346
        %v349 = vunpack.c.l.s4 1934713408
        %v350 = vunpack.c.0.s8 %v349
        %v351 = vlaneseq
        %v352 = vshrl.u32 %v351, 7
        %v353 = vsub.s32 %v350, %v352
        %v354 = vrot.slane %v340, %v353
        %v355 = vcombine.low %v322, %v338
        %v356 = vcombine.high %v322, %v338
        %v358 = vunpack.c.l.s4 1934713408
        %v359 = vunpack.c.0.s8 %v358
        %v360 = vlaneseq
        %v361 = vshrl.u32 %v360, 7
        %v362 = vsub.s32 %v359, %v361
        %v363 = vrot.slane %v355, %v362
        %v365 = vunpack.c.l.s4 1934713408
        %v366 = vunpack.c.0.s8 %v365
        %v367 = vlaneseq
        %v368 = vshrl.u32 %v367, 7
        %v369 = vsub.s32 %v366, %v368
        %v370 = vrot.slane %v356, %v369
        %v371 = vcombine.high %v347, 0.0
        %v372 = vcombine.high %v354, 0.0
        %v373 = vcombine.high %v363, 0.0
        %v374 = vcombine.high %v370, 0.0
        %v375 = vcombine.low %v300, %v304
        %v376 = vcombine.high %v300, %v304
        %v378 = vunpack.c.l.s4 1983009808
        %v379 = vunpack.c.0.s8 %v378
        %v380 = vlaneseq
        %v381 = vshrl.u32 %v380, 7
        %v382 = vsub.s32 %v379, %v381
        %v383 = vrot.slane %v375, %v382
        %v385 = vunpack.c.l.s4 1983009808
        %v386 = vunpack.c.0.s8 %v385
        %v387 = vlaneseq
        %v388 = vshrl.u32 %v387, 7
        %v389 = vsub.s32 %v386, %v388
        %v390 = vrot.slane %v376, %v389
        %v391 = vcombine.low %v302, %v306
        %v392 = vcombine.high %v302, %v306
        %v394 = vunpack.c.l.s4 1983009808
        %v395 = vunpack.c.0.s8 %v394
        %v396 = vlaneseq
        %v397 = vshrl.u32 %v396, 7
        %v398 = vsub.s32 %v395, %v397
        %v399 = vrot.slane %v391, %v398
        %v401 = vunpack.c.l.s4 1983009808
        %v402 = vunpack.c.0.s8 %v401
        %v403 = vlaneseq
        %v404 = vshrl.u32 %v403, 7
        %v405 = vsub.s32 %v402, %v404
        %v406 = vrot.slane %v392, %v405
        %v407 = vcombine.low %v383, %v399
        %v408 = vcombine.high %v383, %v399
        %v410 = vunpack.c.l.s4 1934713408
        %v411 = vunpack.c.0.s8 %v410
        %v412 = vlaneseq
        %v413 = vshrl.u32 %v412, 7
        %v414 = vsub.s32 %v411, %v413
        %v415 = vrot.slane %v407, %v414
        %v417 = vunpack.c.l.s4 1934713408
        %v418 = vunpack.c.0.s8 %v417
        %v419 = vlaneseq
        %v420 = vshrl.u32 %v419, 7
        %v421 = vsub.s32 %v418, %v420
        %v422 = vrot.slane %v408, %v421
        %v423 = vcombine.low %v390, %v406
        %v424 = vcombine.high %v390, %v406
        %v426 = vunpack.c.l.s4 1934713408
        %v427 = vunpack.c.0.s8 %v426
        %v428 = vlaneseq
        %v429 = vshrl.u32 %v428, 7
        %v430 = vsub.s32 %v427, %v429
        %v431 = vrot.slane %v423, %v430
        %v433 = vunpack.c.l.s4 1934713408
        %v434 = vunpack.c.0.s8 %v433
        %v435 = vlaneseq
        %v436 = vshrl.u32 %v435, 7
        %v437 = vsub.s32 %v434, %v436
        %v438 = vrot.slane %v424, %v437
        %v439 = vcombine.high %v415, 0.0
        %v440 = vcombine.high %v422, 0.0
        %v441 = vcombine.high %v431, 0.0
        %v442 = vcombine.high %v438, 0.0
        %444 = vrot.lane.b32.xlu0 %v371, 16
        %v445 = vpop.permute.xlu0 %444
        %448 = vrot.lane.b32.xlu0 %v354, 32
        %v449 = vpop.permute.xlu0 %448
        %452 = vrot.lane.b32.xlu0 %v372, 48
        %v453 = vpop.permute.xlu0 %452
        %456 = vrot.lane.b32.xlu0 %v363, 64
        %v457 = vpop.permute.xlu0 %456
        %460 = vrot.lane.b32.xlu0 %v373, 80
        %v461 = vpop.permute.xlu0 %460
        %464 = vrot.lane.b32.xlu0 %v370, 96
        %v465 = vpop.permute.xlu0 %464
        %468 = vrot.lane.b32.xlu0 %v374, 112
        %v469 = vpop.permute.xlu0 %468
        %472 = vrot.lane.b32.xlu0 %v439, 16
        %v473 = vpop.permute.xlu0 %472
        %476 = vrot.lane.b32.xlu0 %v422, 32
        %v477 = vpop.permute.xlu0 %476
        %480 = vrot.lane.b32.xlu0 %v440, 48
        %v481 = vpop.permute.xlu0 %480
        %484 = vrot.lane.b32.xlu0 %v431, 64
        %v485 = vpop.permute.xlu0 %484
        %488 = vrot.lane.b32.xlu0 %v441, 80
        %v489 = vpop.permute.xlu0 %488
        %492 = vrot.lane.b32.xlu0 %v438, 96
        %v493 = vpop.permute.xlu0 %492
        %496 = vrot.lane.b32.xlu0 %v442, 112
        %v497 = vpop.permute.xlu0 %496
        %vm499 = vcmask 130048
        %v500 = vsel %vm499, %v347, %v445
        %vm501 = vcmask 261120
        %v502 = vsel %vm501, %v500, %v449
        %vm503 = vcmask 392192
        %v504 = vsel %vm503, %v502, %v453
        %vm505 = vcmask 523264
        %v506 = vsel %vm505, %v504, %v457
        %vm507 = vcmask 654336
        %v508 = vsel %vm507, %v506, %v461
        %vm509 = vcmask 785408
        %v510 = vsel %vm509, %v508, %v465
        %vm511 = vcmask 916480
        %v512 = vsel %vm511, %v510, %v469
        %v513 = vsel %vm499, %v415, %v473
        %v514 = vsel %vm501, %v513, %v477
        %v515 = vsel %vm503, %v514, %v481
        %v516 = vsel %vm505, %v515, %v485
        %v517 = vsel %vm507, %v516, %v489
        %v518 = vsel %vm509, %v517, %v493
        %v519 = vsel %vm511, %v518, %v497
        %vm520 = vcmask 1043456
        %v521 = vsel %vm520, %v512, 0.0
        %v522 = vsel %vm520, %v519, 0.0
        %v523 = vadd.f32 %v521, %v522
        %524 = vadd.xlane.f32.xlu0 %v523
        %v525 = vpop.xlane.xlu0 %524
        %v526 = vrcp.pop 256.0
        %v527 = vmul.f32 %v525, %v526
        %v528 = vsub.f32 %v512, %v527
        %v529 = vsub.f32 %v519, %v527
        %v530 = vmul.f32 %v528, %v528
        %v531 = vmul.f32 %v529, %v529
        %v532 = vsel %vm520, %v530, 0.0
        %v533 = vsel %vm520, %v531, 0.0
        %v534 = vadd.f32 %v532, %v533
        %535 = vadd.xlane.f32.xlu0 %v534
        %v536 = vpop.xlane.xlu0 %535
        %p537 = scmp.eq.s32.totalorder %s298, 0
        // Predicated region
        $region45: #{tpu_custom_call.1} parent=39 // pred_check
          %p538 = pneg %p537
        $region46: #{tpu_custom_call.1} parent=39 // pred_check_branch
          %540 = sbr.rel (%p538) target = $region48
        $region47: #{tpu_custom_call.1} parent=39 // pred_region
          %vm541 = vcmask 3072
          %542 = vst.msk [vmem:[#allocation2] sm:$0xf] %vm541, %v527
          %543 = vst.msk [vmem:[#allocation3] sm:$0xf] %vm541, %v536
        $region48: #{tpu_custom_call.1} parent=39 // pred_fallthru
          _
        %p544 = scmp.gt.s32.totalorder %s298, 0
        // Predicated region
        $region49: #{tpu_custom_call.1} parent=39 // pred_check
          %p545 = pneg %p544
        $region50: #{tpu_custom_call.1} parent=39 // pred_check_branch
          %547 = sbr.rel (%p545) target = $region52
        $region51: #{tpu_custom_call.1} parent=39 // pred_region
          %s548 = scvt.s32.f32 %s298
          %s549 = smul.f32 %s548, 256.0
          %s550 = sadd.f32 %s549, 256.0
          %v551 = vld [vmem:[#allocation2] sm:$0xf]
          %v552 = vsub.f32 %v527, %v551
          %v553 = vstv %s550
          %v554 = vrcp.pop %v553
          %s555 = vtos %v554
          %s556 = smul.f32 256.0, %s555
          %v557 = vstv %s556
          %v558 = vmul.f32 %v552, %v557
          %v559 = vadd.f32 %v551, %v558
          %vm560 = vcmask 3072
          %561 = vst.msk [vmem:[#allocation2] sm:$0xf] %vm560, %v559
          %v562 = vld [vmem:[#allocation3] sm:$0xf]
          %v563 = vadd.f32 %v562, %v536
          %v564 = vmul.f32 %v552, %v552
          %s565 = smul.f32 %s549, 256.0
          %v566 = vstv %s550
          %v567 = vrcp.pop %v566
          %s568 = vtos %v567
          %s569 = smul.f32 %s565, %s568
          %v570 = vstv %s569
          %v571 = vmul.f32 %v564, %v570
          %v572 = vadd.f32 %v563, %v571
          %573 = vst.msk [vmem:[#allocation3] sm:$0xf] %vm560, %v572
        $region52: #{tpu_custom_call.1} parent=39 // pred_fallthru
          _
        %p574 = scmp.eq.s32.totalorder %s298, 1
        // Predicated region
        $region53: #{tpu_custom_call.1} parent=39 // pred_check
          %p575 = pneg %p574
        $region54: #{tpu_custom_call.1} parent=39 // pred_check_branch
          %577 = sbr.rel (%p575) target = $region56
        $region55: #{tpu_custom_call.1} parent=39 // pred_region
          %v578 = vld [vmem:[#allocation2] sm:$0xf]
          %v579 = vld [vmem:[#allocation3] sm:$0xf]
          %v580 = vrcp.pop 511.0
          %v581 = vmul.f32 %v579, %v580
          %v582 = vld [vmem:[%s1] sm:$0xf]
          %v583 = vmul.f32 %v582, 0.7
          %v584 = vmul.f32 %v578, 0.3
          %v585 = vadd.f32 %v583, %v584
          %v586 = vld [vmem:[%s2] sm:$0xf]
          %v587 = vmul.f32 %v586, 0.7
          %v588 = vmul.f32 %v581, 0.3
          %v589 = vadd.f32 %v587, %v588
          %v590 = vld [vmem:[%s3] sm:$0xf]
          %v591 = vadd.f32 %v589, 1e-05
          %v592 = vrsqrt.pop %v591
          %v593 = vmul.f32 %v590, %v592
          %vm594 = vcmask 3072
          %595 = vst.msk [vmem:[%s5] sm:$0xf] %vm594, %v593
          %v596 = vld [vmem:[%s4] sm:$0xf]
          %v597 = vmul.f32 %v585, %v593
          %v598 = vsub.f32 %v596, %v597
          %599 = vst.msk [vmem:[%s6] sm:$0xf] %vm594, %v598
        $region56: #{tpu_custom_call.1} parent=39 // pred_fallthru
          _
        // Predicated region
        $region57: #{tpu_custom_call.1} parent=39 // pred_check
          %p600 = pneg %p158
        $region58: #{tpu_custom_call.1} parent=39 // pred_check_branch
          %602 = sbr.rel (%p600) target = $region60
        $region59: #{tpu_custom_call.1} parent=39 // pred_region
          _
        $region60: #{tpu_custom_call.1} parent=39 // pred_fallthru
          _
        // Predicated region
        $region61: #{tpu_custom_call.1} parent=39 // pred_check
          %p603 = pneg %p179
        $region62: #{tpu_custom_call.1} parent=39 // pred_check_branch
          %605 = sbr.rel (%p603) target = $region64
        $region63: #{tpu_custom_call.1} parent=39 // pred_region
          _
        $region64: #{tpu_custom_call.1} parent=39 // pred_fallthru
          _
        // Predicated region
        $region65: #{tpu_custom_call.1} parent=39 // pred_check
          %p606 = pneg %p158
        $region66: #{tpu_custom_call.1} parent=39 // pred_check_branch
          %608 = sbr.rel (%p606) target = $region68
        $region67: #{tpu_custom_call.1} parent=39 // pred_region
          _
        $region68: #{tpu_custom_call.1} parent=39 // pred_fallthru
          _
        // Predicated region
        $region69: #{tpu_custom_call.1} parent=39 // pred_check
          %p609 = pneg %p179
        $region70: #{tpu_custom_call.1} parent=39 // pred_check_branch
          %611 = sbr.rel (%p609) target = $region72
        $region71: #{tpu_custom_call.1} parent=39 // pred_region
          _
        $region72: #{tpu_custom_call.1} parent=39 // pred_fallthru
          _
      $region40: #{tpu_custom_call.1} parent=5 // pred_fallthru
        _
      %p612 = scmp.le.s32.totalorder 2, %s16
      // Predicated region
      $region73: #{tpu_custom_call.1} parent=5 // pred_check
        %p613 = pneg %p612
      $region74: #{tpu_custom_call.1} parent=5 // pred_check_branch
        %615 = sbr.rel (%p613) target = $region76
      $region75: #{tpu_custom_call.1} parent=5 // pred_region
        %s616 = ssub.s32 %s16, 2
      $region76: #{tpu_custom_call.1} parent=5 // pred_fallthru
        _
    $region6: #{tpu_custom_call.1} parent=1 // loop_footer
      %s20 = sadd.s32 1, %s16
    $region7: #{tpu_custom_call.1} parent=1 // loop_footer_branch
      %15 = sbr.rel target = $region3
    $region8: #{tpu_custom_call.1} parent=1 // loop_exit
      _
    %617 = vsyncpa [#allocation5], 1
    %s618 = scalar_lea.sflag [#allocation5], 1
    %619 = vsyncpa %s618, 1

</llo_original>
